<compile_context>
chip_gen: v7x
topology: tpu7x:2x2x1
jax: 0.10.0
libtpu: 0.0.40
codegen_flags: <defaults>
</compile_context>

<pallas_src>
import math

import jax
import jax.numpy as jnp
from jax.experimental import pallas as pl
from jax.experimental.pallas import tpu as pltpu


_PREF_TM = 512            # preferred row tile (adj rows)
_PREF_TN = 512            # preferred output-feature tile
_PREF_TK = 2048           # preferred reduction tile
_VMEM_TILE_BUDGET = 30 * 1024 * 1024   # double-buffered working set budget
_VMEM_LIMIT_BYTES = 40 * 1024 * 1024   # > v5e 16 MiB scoped default, < v7x 64 MiB


# ----------------------------------------------------------------------------
# Padding / tile planning helpers
# ----------------------------------------------------------------------------
def _round_up(x, m):
    return ((x + m - 1) // m) * m


def _largest_divisor_tile(padded, pref):
    """Largest multiple of 128 that divides `padded` and is <= pref (>=128)."""
    best = 128
    t = 128
    limit = min(pref, padded)
    while t <= limit:
        if padded % t == 0:
            best = t
        t += 128
    return best


def _choose_padding(dim, pref):
    """Pad `dim` to a multiple of the largest power-of-two 128-multiple tile
    <= pref whose padding overhead stays under 25%. Guarantees tiles never
    collapse to 128 just because the 128-padded dim has an awkward factor."""
    base = _round_up(dim, 128)
    padded = base
    t = 256
    while t <= pref:
        cand = _round_up(dim, t)
        if cand * 4 <= base * 5:          # <= 25% extra padding
            padded = cand
        t *= 2
    return padded


def _pad2d(a, rows, cols):
    pr, pc = rows - a.shape[0], cols - a.shape[1]
    if pr or pc:
        a = jnp.pad(a, ((0, pr), (0, pc)))
    return a


# ----------------------------------------------------------------------------
# Kernels
# ----------------------------------------------------------------------------
def _mm_direct_kernel(a_ref, b_ref, o_ref):
    """f32 output block is resident across the K axis -> accumulate in place
    (no separate accumulator scratch, no final acc->out VMEM copy)."""
    @pl.when(pl.program_id(2) == 0)
    def _():
        o_ref[...] = jnp.zeros_like(o_ref)

    o_ref[...] += jnp.dot(a_ref[...].astype(jnp.bfloat16),
                          b_ref[...].astype(jnp.bfloat16),
                          preferred_element_type=jnp.float32)


def _mm_bias_direct_kernel(a_ref, b_ref, bias_ref, o_ref):
    @pl.when(pl.program_id(2) == 0)
    def _():
        o_ref[...] = jnp.zeros_like(o_ref)

    o_ref[...] += jnp.dot(a_ref[...].astype(jnp.bfloat16),
                          b_ref[...].astype(jnp.bfloat16),
                          preferred_element_type=jnp.float32)

    @pl.when(pl.program_id(2) == pl.num_programs(2) - 1)
    def _():
        o_ref[...] += bias_ref[...]          # bias add stays in f32


def _mm_acc_kernel(a_ref, b_ref, o_ref, acc_ref):
    """Non-f32 output: keep an f32 VMEM accumulator, cast once at the end."""
    @pl.when(pl.program_id(2) == 0)
    def _():
        acc_ref[...] = jnp.zeros_like(acc_ref)

    acc_ref[...] += jnp.dot(a_ref[...].astype(jnp.bfloat16),
                            b_ref[...].astype(jnp.bfloat16),
                            preferred_element_type=jnp.float32)

    @pl.when(pl.program_id(2) == pl.num_programs(2) - 1)
    def _():
        o_ref[...] = acc_ref[...].astype(o_ref.dtype)


def _mm_bias_acc_kernel(a_ref, b_ref, bias_ref, o_ref, acc_ref):
    @pl.when(pl.program_id(2) == 0)
    def _():
        acc_ref[...] = jnp.zeros_like(acc_ref)

    acc_ref[...] += jnp.dot(a_ref[...].astype(jnp.bfloat16),
                            b_ref[...].astype(jnp.bfloat16),
                            preferred_element_type=jnp.float32)

    @pl.when(pl.program_id(2) == pl.num_programs(2) - 1)
    def _():
        o_ref[...] = (acc_ref[...] + bias_ref[...]).astype(o_ref.dtype)


# ----------------------------------------------------------------------------
# Tiled matmul on pre-padded operands (returns the padded output)
# ----------------------------------------------------------------------------
def _matmul_padded(a, b, bias=None, *, out_dtype, tm, tn, tk):
    """a @ b (+ bias). a, b already padded so tm|M, tk|K, tn|N. Inputs may be
    f32 (cast to bf16 in-kernel) or bf16; accumulation is f32."""
    M, K = a.shape
    K2, N = b.shape
    assert K == K2, (a.shape, b.shape)
    assert M % tm == 0 and K % tk == 0 and N % tn == 0, (M, K, N, tm, tk, tn)

    out_itemsize = jnp.dtype(out_dtype).itemsize
    use_acc = jnp.dtype(out_dtype) != jnp.dtype(jnp.float32)

    def footprint(tm_, tk_):
        f = 2 * tm_ * tk_ * a.dtype.itemsize      # double-buffered A tiles
        f += 2 * tk_ * tn * b.dtype.itemsize      # double-buffered B tiles
        f += 2 * tm_ * tn * out_itemsize          # double-buffered out tiles
        if use_acc:
            f += tm_ * tn * 4                     # f32 accumulator scratch
        if bias is not None:
            f += 2 * tn * 4
        return f

    # Shrink TK first (fewer accumulator RMW rounds lost), then TM, until the
    # working set fits the budget (safe on v7x's 64 MiB physical VMEM).
    while footprint(tm, tk) > _VMEM_TILE_BUDGET and tk > 128:
        tk = _largest_divisor_tile(K, tk - 128)
    while footprint(tm, tk) > _VMEM_TILE_BUDGET and tm > 128:
        tm = _largest_divisor_tile(M, tm - 128)

    grid = (M // tm, N // tn, K // tk)

    in_specs = [
        pl.BlockSpec((tm, tk), lambda i, j, k: (i, k)),
        pl.BlockSpec((tk, tn), lambda i, j, k: (k, j)),
    ]
    operands = [a, b]

    # Honest bytes_accessed: A is re-read once per j block, B once per i block.
    bytes_accessed = (a.size * a.dtype.itemsize * grid[1]
                      + b.size * b.dtype.itemsize * grid[0]
                      + M * N * out_itemsize)

    if bias is not None:
        in_specs.append(pl.BlockSpec((1, tn), lambda i, j, k: (0, j)))
        operands.append(bias)
        bytes_accessed += bias.size * bias.dtype.itemsize * grid[0]
        kernel = _mm_bias_acc_kernel if use_acc else _mm_bias_direct_kernel
    else:
        kernel = _mm_acc_kernel if use_acc else _mm_direct_kernel

    scratch_shapes = [pltpu.VMEM((tm, tn), jnp.float32)] if use_acc else []

    return pl.pallas_call(
        kernel,
        out_shape=jax.ShapeDtypeStruct((M, N), out_dtype),
        grid_spec=pltpu.PrefetchScalarGridSpec(
            num_scalar_prefetch=0,
            grid=grid,
            in_specs=in_specs,
            out_specs=pl.BlockSpec((tm, tn), lambda i, j, k: (i, j)),
            scratch_shapes=scratch_shapes,
        ),
        compiler_params=pltpu.CompilerParams(
            dimension_semantics=("parallel", "parallel", "arbitrary"),
            vmem_limit_bytes=_VMEM_LIMIT_BYTES,
        ),
        cost_estimate=pl.CostEstimate(
            flops=2 * M * N * K,
            transcendentals=0,
            bytes_accessed=int(bytes_accessed),
        ),
    )(*operands)


# ----------------------------------------------------------------------------
# GraphConvolution forward
# ----------------------------------------------------------------------------
def graph_convolution(x, adj, weight, bias=None):
    """x: [N, in_f], adj: [N, N] dense, weight: [in_f, out_f], bias: [out_f] | None."""
    N, Fin = x.shape
    Fout = weight.shape[1]
    assert adj.shape == (N, N) and weight.shape[0] == Fin

    # --- single up-front padding / tile plan shared by both matmuls ---------
    Np = _choose_padding(N, _PREF_TK)        # node dim: rows of adj AND K of adj@support
    Fin_p = _choose_padding(Fin, _PREF_TK)
    Fout_p = _round_up(Fout, 128)

    tm = _largest_divisor_tile(Np, _PREF_TM)
    tn = _largest_divisor_tile(Fout_p, _PREF_TN)
    tk1 = _largest_divisor_tile(Fin_p, _PREF_TK)
    tk2 = _largest_divisor_tile(Np, _PREF_TK)

    # Keep >= 2 row blocks so v7x's second TensorCore gets work (the j axis is
    # usually a single block for GCN-sized out_features).
    if Np // tm < 2 and Np >= 256:
        tm = _largest_divisor_tile(Np, Np // 2)

    # Pad once. X / adj stay f32 in HBM and are cast to bf16 inside the kernel
    # (no extra read/write pass over the bandwidth-dominant adjacency).
    x_p = _pad2d(x.astype(jnp.float32), Np, Fin_p)
    w_p = _pad2d(weight.astype(jnp.float32), Fin_p, Fout_p)
    adj_p = _pad2d(adj.astype(jnp.float32), Np, Np)
    bias_p = None
    if bias is not None:
        bias_p = _pad2d(bias.reshape(1, -1).astype(jnp.float32), 1, Fout_p)

    # support = X @ W -- computed once, kept PADDED and bf16 so the dominant
    # second matmul reads half the bytes and needs no slice/re-pad passes.
    support_p = _matmul_padded(x_p, w_p, out_dtype=jnp.bfloat16,
                               tm=tm, tn=tn, tk=tk1)

    # output = adj @ support (+ bias) -- the only O(N^2 * out_f) work.
    out_p = _matmul_padded(adj_p, support_p, bias=bias_p,
                           out_dtype=jnp.float32, tm=tm, tn=tn, tk=tk2)

    if Np != N or Fout_p != Fout:
        out_p = out_p[:N, :Fout]
    return out_p


def init_params(key, in_features, out_features, use_bias=True):
    """Deterministic synthetic init mirroring kaiming_uniform_ + zeros_."""
    kw, _ = jax.random.split(key)
    # PyTorch kaiming_uniform_ on a [in_f, out_f] tensor -> fan_in = out_f.
    fan_in = out_features
    bound = math.sqrt(2.0) * math.sqrt(3.0 / fan_in)
    weight = jax.random.uniform(
        kw, (in_features, out_features), dtype=jnp.float32,
        minval=-bound, maxval=bound)
    bias = jnp.zeros((out_features,), jnp.float32) if use_bias else None
    return weight, bias


if __name__ == "__main__":
    key = jax.random.PRNGKey(0)
    k_x, k_adj, k_p = jax.random.split(key, 3)

    N, in_features, out_features = 16, 32, 32

    x = jax.random.normal(k_x, (N, in_features), dtype=jnp.float32)
    # Dense synthetic adjacency with self-loops, row-normalized.
    adj_raw = (jax.random.uniform(k_adj, (N, N)) > 0.7).astype(jnp.float32)
    adj = adj_raw + jnp.eye(N, dtype=jnp.float32)
    deg = jnp.sum(adj, axis=1, keepdims=True)
    adj = adj / deg

    weight, bias = init_params(k_p, in_features, out_features, use_bias=True)

    out = graph_convolution(x, adj, weight, bias)
    out = jax.block_until_ready(out)

    # f32 reference; tolerance accounts for bf16 casts with f32 accumulation.
    ref = adj @ (x @ weight) + bias[None, :]
    assert out.shape == (N, out_features)
    assert jnp.allclose(out, ref, atol=5e-2, rtol=5e-2), float(
        jnp.max(jnp.abs(out - ref)))

    # Exercise the no-bias kernel path as well.
    out_nb = jax.block_until_ready(graph_convolution(x, adj, weight, None))
    ref_nb = adj @ (x @ weight)
    assert jnp.allclose(out_nb, ref_nb, atol=5e-2, rtol=5e-2)

    print("KERNEL_OK")
</pallas_src>

<mosaic_0001>
module attributes {stable_mosaic.version = 11 : i64} {
  func.func @_mm_acc_kernel(%arg0: i32, %arg1: i32, %arg2: i32, %arg3: memref<128x128xf32, #tpu.memory_space<vmem>>, %arg4: memref<128x128xf32, #tpu.memory_space<vmem>>, %arg5: memref<128x128xbf16, #tpu.memory_space<vmem>>, %arg6: memref<128x128xf32, #tpu.memory_space<vmem>>) attributes {dimension_semantics = [#tpu.dimension_semantics<parallel>, #tpu.dimension_semantics<parallel>, #tpu.dimension_semantics<arbitrary>], iteration_bounds = array<i64: 1, 1, 1>, scalar_prefetch = 0 : i64, scratch_operands = 1 : i64, tpu.core_type = #tpu.core_type<tc>, window_params = [{transform_indices = @transform_0, window_bounds = array<i64: 128, 128>}, {transform_indices = @transform_1, window_bounds = array<i64: 128, 128>}, {transform_indices = @transform_2, window_bounds = array<i64: 128, 128>}]} {
    %c0_i32 = arith.constant 0 : i32
    %0 = arith.cmpi eq, %arg2, %c0_i32 : i32
    %1 = arith.extui %0 : i1 to i32
    %c0_i32_0 = arith.constant 0 : i32
    %2 = arith.cmpi ne, %1, %c0_i32_0 : i32
    scf.if %2 {
      %cst_10 = arith.constant 0.000000e+00 : f32
      %14 = vector.broadcast %cst_10 : f32 to vector<128x128xf32>
      %c0_11 = arith.constant 0 : index
      %c0_12 = arith.constant 0 : index
      %15 = vector.load %arg6[%c0_11, %c0_12] : memref<128x128xf32, #tpu.memory_space<vmem>>, vector<128x128xf32>
      tpu.vector_store %arg6[%c0_11, %c0_12], %14 {strides = array<i32>} : memref<128x128xf32, #tpu.memory_space<vmem>>, vector<128x128xf32>,
    } else {
    }
    %c0 = arith.constant 0 : index
    %c0_1 = arith.constant 0 : index
    %3 = vector.load %arg6[%c0, %c0_1] : memref<128x128xf32, #tpu.memory_space<vmem>>, vector<128x128xf32>
    %c0_2 = arith.constant 0 : index
    %c0_3 = arith.constant 0 : index
    %4 = vector.load %arg3[%c0_2, %c0_3] : memref<128x128xf32, #tpu.memory_space<vmem>>, vector<128x128xf32>
    %5 = arith.truncf %4 : vector<128x128xf32> to vector<128x128xbf16>
    %c0_4 = arith.constant 0 : index
    %c0_5 = arith.constant 0 : index
    %6 = vector.load %arg4[%c0_4, %c0_5] : memref<128x128xf32, #tpu.memory_space<vmem>>, vector<128x128xf32>
    %7 = arith.truncf %6 : vector<128x128xf32> to vector<128x128xbf16>
    %cst = arith.constant dense<0.000000e+00> : vector<128x128xf32>
    %8 = tpu.matmul %5, %7, %cst {dimension_numbers = #tpu.dot_dimension_numbers<[1], [0], [0], [1], [0, 0, 1, 1], [], []>} : vector<128x128xbf16>, vector<128x128xbf16>, vector<128x128xf32> -> vector<128x128xf32>
    %9 = arith.addf %3, %8 : vector<128x128xf32>
    %c0_6 = arith.constant 0 : index
    %c0_7 = arith.constant 0 : index
    %10 = vector.load %arg6[%c0_6, %c0_7] : memref<128x128xf32, #tpu.memory_space<vmem>>, vector<128x128xf32>
    tpu.vector_store %arg6[%c0_6, %c0_7], %9 {strides = array<i32>} : memref<128x128xf32, #tpu.memory_space<vmem>>, vector<128x128xf32>,
    %c0_i32_8 = arith.constant 0 : i32
    %11 = arith.cmpi eq, %arg2, %c0_i32_8 : i32
    %12 = arith.extui %11 : i1 to i32
    %c0_i32_9 = arith.constant 0 : i32
    %13 = arith.cmpi ne, %12, %c0_i32_9 : i32
    scf.if %13 {
      %c0_10 = arith.constant 0 : index
      %c0_11 = arith.constant 0 : index
      %14 = vector.load %arg6[%c0_10, %c0_11] : memref<128x128xf32, #tpu.memory_space<vmem>>, vector<128x128xf32>
      %15 = arith.truncf %14 : vector<128x128xf32> to vector<128x128xbf16>
      %c0_12 = arith.constant 0 : index
      %c0_13 = arith.constant 0 : index
      %16 = vector.load %arg5[%c0_12, %c0_13] : memref<128x128xbf16, #tpu.memory_space<vmem>>, vector<128x128xbf16>
      tpu.vector_store %arg5[%c0_12, %c0_13], %15 {strides = array<i32>} : memref<128x128xbf16, #tpu.memory_space<vmem>>, vector<128x128xbf16>,
    } else {
    }
    return
  }
  func.func @transform_0(%arg0: i32, %arg1: i32, %arg2: i32) -> (i32, i32) {
    %c0_i32 = arith.constant 0 : i32
    return %arg0, %arg2 : i32, i32
  }
  func.func @transform_1(%arg0: i32, %arg1: i32, %arg2: i32) -> (i32, i32) {
    %c0_i32 = arith.constant 0 : i32
    return %arg2, %arg1 : i32, i32
  }
  func.func @transform_2(%arg0: i32, %arg1: i32, %arg2: i32) -> (i32, i32) {
    %c0_i32 = arith.constant 0 : i32
    return %arg0, %arg1 : i32, i32
  }
}

</mosaic_0001>

<llo_original>
// kernel: tpu_custom_call.1
$region0: #{tpu_custom_call.1}
  #allocation0 [shape = 'u32[]', space=smem, size = 0x4, offset = 0x4, fixed_abs, tag = 'smem constant byte address 0x4 - core index']
  #allocation1 [shape = 'u32[144,128]{1,0:T(1,128)}', space=vmem, size = 0x12000, scoped, tag = 'internal scratch']
  #allocation2 [shape = 'f32[128,128]{1,0:T(8,128)}', space=vmem, size = 0x10000, scoped, tag = 'scratch operand']
  %s0 = inlined_call_operand.hbm [shape: f32[128,128], index: 0, kind: input, shape index: {}]
  %s1 = inlined_call_operand.hbm [shape: f32[128,128], index: 1, kind: input, shape index: {}]
  %s2 = inlined_call_operand.hbm [shape: bf16[128,128], index: 2, kind: output, shape index: {}]
  %s3 = sld [smem:[#allocation0]]
  $region34: #{tpu_custom_call.1} parent=0
    _
  %s5 = ssub.s32 1, %s3
  %s6 = scalar_select 0, %s5, %s3
  $region1: #{tpu_custom_call.1} parent=0
    #allocation3 [shape = 'u8[65536]{0}', space=vmem, size = 0x10000, scoped, tag = 'input window, operand 0, single buffered']
    #allocation4 [shape = 's32[1]{0}', space=sflag, size = 0x4, scoped, tag = 'scoped memory for tpu_custom_call.1']
    #allocation5 [shape = 's32[1]{0}', space=sflag, size = 0x4, scoped, tag = 'scoped memory for tpu_custom_call.1']
    #allocation6 [shape = 'u8[65536]{0}', space=vmem, size = 0x10000, scoped, tag = 'input window, operand 1, single buffered']
    #allocation7 [shape = 's32[1]{0}', space=sflag, size = 0x4, scoped, tag = 'scoped memory for tpu_custom_call.1']
    #allocation8 [shape = 'u8[32768]{0}', space=vmem, size = 0x8000, scoped, tag = 'output window, operand 0, single buffered']
    %7 = vsyncpa [#allocation4], 0
    %8 = vsyncpa [#allocation7], 0
    %9 = vsyncpa [#allocation5], 0
    // Predicated region
    $region2: #{tpu_custom_call.1} parent=1 // pred_check
      _
    $region3: #{tpu_custom_call.1} parent=1 // pred_check_branch
      %11 = sbr.rel (0) target = $region5
    $region4: #{tpu_custom_call.1} parent=1 // pred_region
      %s13 = ssub.s32 2048, 2048
      %14 = vsyncadd [#allocation4], %s13
      %s15 = sshll.u32 [#allocation3], 4
      %s16 = int_to_ptr.vmem [resolvable:$true] %s15
      %21 = dma.hbm_to_vmem [thread:$0]  %s0, 2048, %s16, [#allocation4], 128, 128, 8
    $region5: #{tpu_custom_call.1} parent=1 // pred_fallthru
      _
    // Predicated region
    $region6: #{tpu_custom_call.1} parent=1 // pred_check
      _
    $region7: #{tpu_custom_call.1} parent=1 // pred_check_branch
      %23 = sbr.rel (0) target = $region9
    $region8: #{tpu_custom_call.1} parent=1 // pred_region
      %s25 = ssub.s32 2048, 2048
      %26 = vsyncadd [#allocation7], %s25
      %s27 = sshll.u32 [#allocation6], 4
      %s28 = int_to_ptr.vmem [resolvable:$true] %s27
      %33 = dma.hbm_to_vmem [thread:$0]  %s1, 2048, %s28, [#allocation7], 128, 128, 8
    $region9: #{tpu_custom_call.1} parent=1 // pred_fallthru
      _
    // Predicated region
    $region10: #{tpu_custom_call.1} parent=1 // pred_check
      _
    $region11: #{tpu_custom_call.1} parent=1 // pred_check_branch
      %35 = sbr.rel (0) target = $region13
    $region12: #{tpu_custom_call.1} parent=1 // pred_region
      %36 = dma.done [#allocation4], 2048
    $region13: #{tpu_custom_call.1} parent=1 // pred_fallthru
      _
    // Predicated region
    $region14: #{tpu_custom_call.1} parent=1 // pred_check
      _
    $region15: #{tpu_custom_call.1} parent=1 // pred_check_branch
      %38 = sbr.rel (0) target = $region17
    $region16: #{tpu_custom_call.1} parent=1 // pred_region
      %39 = dma.done [#allocation7], 2048
    $region17: #{tpu_custom_call.1} parent=1 // pred_fallthru
      _
    %p41 = scmp.eq.s32.totalorder 0, 0
    // Predicated region
    $region18: #{tpu_custom_call.1} parent=1 // pred_check
      %p42 = pneg %p41
    $region19: #{tpu_custom_call.1} parent=1 // pred_check_branch
      %44 = sbr.rel (%p42) target = $region21
    $region20: #{tpu_custom_call.1} parent=1 // pred_region
      %45 = vst [vmem:[#allocation2] sm:$0xff] 0.0
      %46 = vst [vmem:[#allocation2 + $0x8] sm:$0xff] 0.0
      %47 = vst [vmem:[#allocation2 + $0x10] sm:$0xff] 0.0
      %48 = vst [vmem:[#allocation2 + $0x18] sm:$0xff] 0.0
      %49 = vst [vmem:[#allocation2 + $0x20] sm:$0xff] 0.0
      %50 = vst [vmem:[#allocation2 + $0x28] sm:$0xff] 0.0
      %51 = vst [vmem:[#allocation2 + $0x30] sm:$0xff] 0.0
      %52 = vst [vmem:[#allocation2 + $0x38] sm:$0xff] 0.0
      %53 = vst [vmem:[#allocation2 + $0x40] sm:$0xff] 0.0
      %54 = vst [vmem:[#allocation2 + $0x48] sm:$0xff] 0.0
      %55 = vst [vmem:[#allocation2 + $0x50] sm:$0xff] 0.0
      %56 = vst [vmem:[#allocation2 + $0x58] sm:$0xff] 0.0
      %57 = vst [vmem:[#allocation2 + $0x60] sm:$0xff] 0.0
      %58 = vst [vmem:[#allocation2 + $0x68] sm:$0xff] 0.0
      %59 = vst [vmem:[#allocation2 + $0x70] sm:$0xff] 0.0
      %60 = vst [vmem:[#allocation2 + $0x78] sm:$0xff] 0.0
    $region21: #{tpu_custom_call.1} parent=1 // pred_fallthru
      _
    %v61 = vld [vmem:[#allocation2] sm:$0xff]
    %v62 = vld [vmem:[#allocation2 + $0x8] sm:$0xff]
    %v63 = vld [vmem:[#allocation2 + $0x10] sm:$0xff]
    %v64 = vld [vmem:[#allocation2 + $0x18] sm:$0xff]
    %v65 = vld [vmem:[#allocation2 + $0x20] sm:$0xff]
    %v66 = vld [vmem:[#allocation2 + $0x28] sm:$0xff]
    %v67 = vld [vmem:[#allocation2 + $0x30] sm:$0xff]
    %v68 = vld [vmem:[#allocation2 + $0x38] sm:$0xff]
    %v69 = vld [vmem:[#allocation2 + $0x40] sm:$0xff]
    %v70 = vld [vmem:[#allocation2 + $0x48] sm:$0xff]
    %v71 = vld [vmem:[#allocation2 + $0x50] sm:$0xff]
    %v72 = vld [vmem:[#allocation2 + $0x58] sm:$0xff]
    %v73 = vld [vmem:[#allocation2 + $0x60] sm:$0xff]
    %v74 = vld [vmem:[#allocation2 + $0x68] sm:$0xff]
    %v75 = vld [vmem:[#allocation2 + $0x70] sm:$0xff]
    %v76 = vld [vmem:[#allocation2 + $0x78] sm:$0xff]
    %v77 = vld [vmem:[#allocation3] sm:$0xff]
    %v78 = vld [vmem:[#allocation3 + $0x8] sm:$0xff]
    %v79 = vld [vmem:[#allocation3 + $0x10] sm:$0xff]
    %v80 = vld [vmem:[#allocation3 + $0x18] sm:$0xff]
    %v81 = vld [vmem:[#allocation3 + $0x20] sm:$0xff]
    %v82 = vld [vmem:[#allocation3 + $0x28] sm:$0xff]
    %v83 = vld [vmem:[#allocation3 + $0x30] sm:$0xff]
    %v84 = vld [vmem:[#allocation3 + $0x38] sm:$0xff]
    %v85 = vld [vmem:[#allocation3 + $0x40] sm:$0xff]
    %v86 = vld [vmem:[#allocation3 + $0x48] sm:$0xff]
    %v87 = vld [vmem:[#allocation3 + $0x50] sm:$0xff]
    %v88 = vld [vmem:[#allocation3 + $0x58] sm:$0xff]
    %v89 = vld [vmem:[#allocation3 + $0x60] sm:$0xff]
    %v90 = vld [vmem:[#allocation3 + $0x68] sm:$0xff]
    %v91 = vld [vmem:[#allocation3 + $0x70] sm:$0xff]
    %v92 = vld [vmem:[#allocation3 + $0x78] sm:$0xff]
    %v93 = vpack.c.bf16 %v78, %v77
    %v94 = vpack.c.bf16 %v80, %v79
    %v95 = vpack.c.bf16 %v82, %v81
    %v96 = vpack.c.bf16 %v84, %v83
    %v97 = vpack.c.bf16 %v86, %v85
    %v98 = vpack.c.bf16 %v88, %v87
    %v99 = vpack.c.bf16 %v90, %v89
    %v100 = vpack.c.bf16 %v92, %v91
    %v101 = vld [vmem:[#allocation6] sm:$0xff]
    %v102 = vld [vmem:[#allocation6 + $0x8] sm:$0xff]
    %v103 = vld [vmem:[#allocation6 + $0x10] sm:$0xff]
    %v104 = vld [vmem:[#allocation6 + $0x18] sm:$0xff]
    %v105 = vld [vmem:[#allocation6 + $0x20] sm:$0xff]
    %v106 = vld [vmem:[#allocation6 + $0x28] sm:$0xff]
    %v107 = vld [vmem:[#allocation6 + $0x30] sm:$0xff]
    %v108 = vld [vmem:[#allocation6 + $0x38] sm:$0xff]
    %v109 = vld [vmem:[#allocation6 + $0x40] sm:$0xff]
    %v110 = vld [vmem:[#allocation6 + $0x48] sm:$0xff]
    %v111 = vld [vmem:[#allocation6 + $0x50] sm:$0xff]
    %v112 = vld [vmem:[#allocation6 + $0x58] sm:$0xff]
    %v113 = vld [vmem:[#allocation6 + $0x60] sm:$0xff]
    %v114 = vld [vmem:[#allocation6 + $0x68] sm:$0xff]
    %v115 = vld [vmem:[#allocation6 + $0x70] sm:$0xff]
    %v116 = vld [vmem:[#allocation6 + $0x78] sm:$0xff]
    %v117 = vpack.c.bf16 %v102, %v101
    %v118 = vpack.c.bf16 %v104, %v103
    %v119 = vpack.c.bf16 %v106, %v105
    %v120 = vpack.c.bf16 %v108, %v107
    %v121 = vpack.c.bf16 %v110, %v109
    %v122 = vpack.c.bf16 %v112, %v111
    %v123 = vpack.c.bf16 %v114, %v113
    %v124 = vpack.c.bf16 %v116, %v115
    %125 = vmatprep.subr.bf16.mxu0 0
    %126 = vmatpush1.bf16.msra.mxu0 %v117
    %127 = vmatprep.subr.bf16.mxu0 0
    %128 = vmatpush1.bf16.msra.mxu0 %v118
    %129 = vmatprep.subr.bf16.mxu0 0
    %130 = vmatpush1.bf16.msra.mxu0 %v119
    %131 = vmatprep.subr.bf16.mxu0 0
    %132 = vmatpush1.bf16.msra.mxu0 %v120
    %133 = vmatprep.subr.bf16.mxu0 0
    %134 = vmatpush1.bf16.msra.mxu0 %v121
    %135 = vmatprep.subr.bf16.mxu0 0
    %136 = vmatpush1.bf16.msra.mxu0 %v122
    %137 = vmatprep.subr.bf16.mxu0 0
    %138 = vmatpush1.bf16.msra.mxu0 %v123
    %139 = vmatprep.subr.bf16.mxu0 0
    %140 = vmatpush1.bf16.msra.mxu0 %v124
    %141 = vmatprep.subr.bf16.mxu0 0
    %142 = vmatpush1.bf16.msra.mxu0 0
    %143 = vmatprep.subr.bf16.mxu0 0
    %144 = vmatpush1.bf16.msra.mxu0 0
    %145 = vmatprep.subr.bf16.mxu0 0
    %146 = vmatpush1.bf16.msra.mxu0 0
    %147 = vmatprep.subr.bf16.mxu0 0
    %148 = vmatpush1.bf16.msra.mxu0 0
    %149 = vmatprep.subr.bf16.mxu0 0
    %150 = vmatpush1.bf16.msra.mxu0 0
    %151 = vmatprep.subr.bf16.mxu0 0
    %152 = vmatpush1.bf16.msra.mxu0 0
    %153 = vmatprep.subr.bf16.mxu0 0
    %154 = vmatpush1.bf16.msra.mxu0 0
    %155 = vmatprep.subr.bf16.mxu0 0
    %156 = vmatpush1.bf16.msra.mxu0 0
    %157 = vmatprep.mubr.bf16.mxu0 0
    %158 = vmatmul.mubr.bf16.gmra.mrb[0].mxu0 %v93
    %v159 = vpop.f32.mrb[0].mxu0
    %v160 = vadd.f32 0.0, %v159
    %v161 = vpop.f32.mrb[0].mxu0
    %v162 = vpop.f32.mrb[0].mxu0
    %v163 = vadd.f32 0.0, %v162
    %v164 = vpop.f32.mrb[0].mxu0
    %165 = vmatprep.mubr.bf16.mxu0 0
    %166 = vmatmul.mubr.bf16.gmra.mrb[0].mxu0 %v94
    %v167 = vpop.f32.mrb[0].mxu0
    %v168 = vadd.f32 0.0, %v167
    %v169 = vpop.f32.mrb[0].mxu0
    %v170 = vpop.f32.mrb[0].mxu0
    %v171 = vadd.f32 0.0, %v170
    %v172 = vpop.f32.mrb[0].mxu0
    %173 = vmatprep.mubr.bf16.mxu0 0
    %174 = vmatmul.mubr.bf16.gmra.mrb[0].mxu0 %v95
    %v175 = vpop.f32.mrb[0].mxu0
    %v176 = vadd.f32 0.0, %v175
    %v177 = vpop.f32.mrb[0].mxu0
    %v178 = vpop.f32.mrb[0].mxu0
    %v179 = vadd.f32 0.0, %v178
    %v180 = vpop.f32.mrb[0].mxu0
    %181 = vmatprep.mubr.bf16.mxu0 0
    %182 = vmatmul.mubr.bf16.gmra.mrb[0].mxu0 %v96
    %v183 = vpop.f32.mrb[0].mxu0
    %v184 = vadd.f32 0.0, %v183
    %v185 = vpop.f32.mrb[0].mxu0
    %v186 = vpop.f32.mrb[0].mxu0
    %v187 = vadd.f32 0.0, %v186
    %v188 = vpop.f32.mrb[0].mxu0
    %189 = vmatprep.mubr.bf16.mxu0 0
    %190 = vmatmul.mubr.bf16.gmra.mrb[0].mxu0 %v97
    %v191 = vpop.f32.mrb[0].mxu0
    %v192 = vadd.f32 0.0, %v191
    %v193 = vpop.f32.mrb[0].mxu0
    %v194 = vpop.f32.mrb[0].mxu0
    %v195 = vadd.f32 0.0, %v194
    %v196 = vpop.f32.mrb[0].mxu0
    %197 = vmatprep.mubr.bf16.mxu0 0
    %198 = vmatmul.mubr.bf16.gmra.mrb[0].mxu0 %v98
    %v199 = vpop.f32.mrb[0].mxu0
    %v200 = vadd.f32 0.0, %v199
    %v201 = vpop.f32.mrb[0].mxu0
    %v202 = vpop.f32.mrb[0].mxu0
    %v203 = vadd.f32 0.0, %v202
    %v204 = vpop.f32.mrb[0].mxu0
    %205 = vmatprep.mubr.bf16.mxu0 0
    %206 = vmatmul.mubr.bf16.gmra.mrb[0].mxu0 %v99
    %v207 = vpop.f32.mrb[0].mxu0
    %v208 = vadd.f32 0.0, %v207
    %v209 = vpop.f32.mrb[0].mxu0
    %v210 = vpop.f32.mrb[0].mxu0
    %v211 = vadd.f32 0.0, %v210
    %v212 = vpop.f32.mrb[0].mxu0
    %213 = vmatprep.mubr.bf16.mxu0 0
    %214 = vmatmul.mubr.bf16.gmra.mrb[0].mxu0 %v100
    %v215 = vpop.f32.mrb[0].mxu0
    %v216 = vadd.f32 0.0, %v215
    %v217 = vpop.f32.mrb[0].mxu0
    %v218 = vpop.f32.mrb[0].mxu0
    %v219 = vadd.f32 0.0, %v218
    %v220 = vpop.f32.mrb[0].mxu0
    %221 = vdwg.mxu0
    %v222 = vadd.f32 %v61, %v160
    %v223 = vadd.f32 %v62, %v163
    %v224 = vadd.f32 %v63, %v168
    %v225 = vadd.f32 %v64, %v171
    %v226 = vadd.f32 %v65, %v176
    %v227 = vadd.f32 %v66, %v179
    %v228 = vadd.f32 %v67, %v184
    %v229 = vadd.f32 %v68, %v187
    %v230 = vadd.f32 %v69, %v192
    %v231 = vadd.f32 %v70, %v195
    %v232 = vadd.f32 %v71, %v200
    %v233 = vadd.f32 %v72, %v203
    %v234 = vadd.f32 %v73, %v208
    %v235 = vadd.f32 %v74, %v211
    %v236 = vadd.f32 %v75, %v216
    %v237 = vadd.f32 %v76, %v219
    %238 = vst [vmem:[#allocation2] sm:$0xff] %v222
    %239 = vst [vmem:[#allocation2 + $0x8] sm:$0xff] %v223
    %240 = vst [vmem:[#allocation2 + $0x10] sm:$0xff] %v224
    %241 = vst [vmem:[#allocation2 + $0x18] sm:$0xff] %v225
    %242 = vst [vmem:[#allocation2 + $0x20] sm:$0xff] %v226
    %243 = vst [vmem:[#allocation2 + $0x28] sm:$0xff] %v227
    %244 = vst [vmem:[#allocation2 + $0x30] sm:$0xff] %v228
    %245 = vst [vmem:[#allocation2 + $0x38] sm:$0xff] %v229
    %246 = vst [vmem:[#allocation2 + $0x40] sm:$0xff] %v230
    %247 = vst [vmem:[#allocation2 + $0x48] sm:$0xff] %v231
    %248 = vst [vmem:[#allocation2 + $0x50] sm:$0xff] %v232
    %249 = vst [vmem:[#allocation2 + $0x58] sm:$0xff] %v233
    %250 = vst [vmem:[#allocation2 + $0x60] sm:$0xff] %v234
    %251 = vst [vmem:[#allocation2 + $0x68] sm:$0xff] %v235
    %252 = vst [vmem:[#allocation2 + $0x70] sm:$0xff] %v236
    %253 = vst [vmem:[#allocation2 + $0x78] sm:$0xff] %v237
    // Predicated region
    $region22: #{tpu_custom_call.1} parent=1 // pred_check
      %p254 = pneg %p41
    $region23: #{tpu_custom_call.1} parent=1 // pred_check_branch
      %256 = sbr.rel (%p254) target = $region25
    $region24: #{tpu_custom_call.1} parent=1 // pred_region
      %v257 = vld [vmem:[#allocation2] sm:$0xff]
      %v258 = vld [vmem:[#allocation2 + $0x8] sm:$0xff]
      %v259 = vld [vmem:[#allocation2 + $0x10] sm:$0xff]
      %v260 = vld [vmem:[#allocation2 + $0x18] sm:$0xff]
      %v261 = vld [vmem:[#allocation2 + $0x20] sm:$0xff]
      %v262 = vld [vmem:[#allocation2 + $0x28] sm:$0xff]
      %v263 = vld [vmem:[#allocation2 + $0x30] sm:$0xff]
      %v264 = vld [vmem:[#allocation2 + $0x38] sm:$0xff]
      %v265 = vld [vmem:[#allocation2 + $0x40] sm:$0xff]
      %v266 = vld [vmem:[#allocation2 + $0x48] sm:$0xff]
      %v267 = vld [vmem:[#allocation2 + $0x50] sm:$0xff]
      %v268 = vld [vmem:[#allocation2 + $0x58] sm:$0xff]
      %v269 = vld [vmem:[#allocation2 + $0x60] sm:$0xff]
      %v270 = vld [vmem:[#allocation2 + $0x68] sm:$0xff]
      %v271 = vld [vmem:[#allocation2 + $0x70] sm:$0xff]
      %v272 = vld [vmem:[#allocation2 + $0x78] sm:$0xff]
      %v273 = vpack.c.bf16 %v258, %v257
      %v274 = vpack.c.bf16 %v260, %v259
      %v275 = vpack.c.bf16 %v262, %v261
      %v276 = vpack.c.bf16 %v264, %v263
      %v277 = vpack.c.bf16 %v266, %v265
      %v278 = vpack.c.bf16 %v268, %v267
      %v279 = vpack.c.bf16 %v270, %v269
      %v280 = vpack.c.bf16 %v272, %v271
      %v289 = vunpack.c.l.b16 %v273
      %v290 = vunpack.c.h.b16 %v273
      %v291 = vunpack.c.l.b16 %v274
      %v292 = vunpack.c.h.b16 %v274
      %v293 = vunpack.c.l.b16 %v275
      %v294 = vunpack.c.h.b16 %v275
      %v295 = vunpack.c.l.b16 %v276
      %v296 = vunpack.c.h.b16 %v276
      %v297 = vunpack.c.l.b16 %v277
      %v298 = vunpack.c.h.b16 %v277
      %v299 = vunpack.c.l.b16 %v278
      %v300 = vunpack.c.h.b16 %v278
      %v301 = vunpack.c.l.b16 %v279
      %v302 = vunpack.c.h.b16 %v279
      %v303 = vunpack.c.l.b16 %v280
      %v304 = vunpack.c.h.b16 %v280
      %v305 = vpack.c.b16 %v289, %v289
      %v306 = vpack.c.b16 %v290, %v290
      %v307 = vpack.c.b16 %v291, %v291
      %v308 = vpack.c.b16 %v292, %v292
      %v309 = vpack.c.b16 %v293, %v293
      %v310 = vpack.c.b16 %v294, %v294
      %v311 = vpack.c.b16 %v295, %v295
      %v312 = vpack.c.b16 %v296, %v296
      %v313 = vpack.c.b16 %v297, %v297
      %v314 = vpack.c.b16 %v298, %v298
      %v315 = vpack.c.b16 %v299, %v299
      %v316 = vpack.c.b16 %v300, %v300
      %v317 = vpack.c.b16 %v301, %v301
      %v318 = vpack.c.b16 %v302, %v302
      %v319 = vpack.c.b16 %v303, %v303
      %v320 = vpack.c.b16 %v304, %v304
      %337 = vst [vmem:[#allocation8] sm:$0xf] %v305
      %338 = vst [vmem:[#allocation8 + $0x4] sm:$0xf] %v306
      %339 = vst [vmem:[#allocation8 + $0x8] sm:$0xf] %v307
      %340 = vst [vmem:[#allocation8 + $0xc] sm:$0xf] %v308
      %341 = vst [vmem:[#allocation8 + $0x10] sm:$0xf] %v309
      %342 = vst [vmem:[#allocation8 + $0x14] sm:$0xf] %v310
      %343 = vst [vmem:[#allocation8 + $0x18] sm:$0xf] %v311
      %344 = vst [vmem:[#allocation8 + $0x1c] sm:$0xf] %v312
      %345 = vst [vmem:[#allocation8 + $0x20] sm:$0xf] %v313
      %346 = vst [vmem:[#allocation8 + $0x24] sm:$0xf] %v314
      %347 = vst [vmem:[#allocation8 + $0x28] sm:$0xf] %v315
      %348 = vst [vmem:[#allocation8 + $0x2c] sm:$0xf] %v316
      %349 = vst [vmem:[#allocation8 + $0x30] sm:$0xf] %v317
      %350 = vst [vmem:[#allocation8 + $0x34] sm:$0xf] %v318
      %351 = vst [vmem:[#allocation8 + $0x38] sm:$0xf] %v319
      %352 = vst [vmem:[#allocation8 + $0x3c] sm:$0xf] %v320
    $region25: #{tpu_custom_call.1} parent=1 // pred_fallthru
      _
    // Predicated region
    $region26: #{tpu_custom_call.1} parent=1 // pred_check
      _
    $region27: #{tpu_custom_call.1} parent=1 // pred_check_branch
      %354 = sbr.rel (0) target = $region29
    $region28: #{tpu_custom_call.1} parent=1 // pred_region
      %s356 = ssub.s32 1024, 1024
      %357 = vsyncadd [#allocation5], %s356
      %s358 = sshll.u32 [#allocation8], 4
      %s359 = int_to_ptr.vmem [resolvable:$true] %s358
      %364 = dma.vmem_to_hbm [thread:$0]  %s359, 1024, %s2, [#allocation5], 64, 64, 4
    $region29: #{tpu_custom_call.1} parent=1 // pred_fallthru
      _
    // Predicated region
    $region30: #{tpu_custom_call.1} parent=1 // pred_check
      _
    $region31: #{tpu_custom_call.1} parent=1 // pred_check_branch
      %366 = sbr.rel (0) target = $region33
    $region32: #{tpu_custom_call.1} parent=1 // pred_region
      %367 = dma.done [#allocation5], 1024
    $region33: #{tpu_custom_call.1} parent=1 // pred_fallthru
      _
    %368 = vsyncpa [#allocation4], 1
    %369 = vsyncpa [#allocation7], 1
    %370 = vsyncpa [#allocation5], 1

</llo_original>
